<compile_context>
chip_gen: v5e
topology: v5e:2x2
jax: 0.10.0
libtpu: 0.0.40
codegen_flags: <defaults>
</compile_context>

<pallas_src>
import functools

import numpy as np
import jax
import jax.numpy as jnp
from jax.experimental import pallas as pl
from jax.experimental.pallas import tpu as pltpu

# ---- ChatGLM-like (tiny) config --------------------------------------------
HIDDEN = 32                               # config.hidden_size
NUM_HEADS = 4                             # config.num_attention_heads (tp=1)
NUM_KV_HEADS = 2                          # config.multi_query_group_num
HEAD_DIM = HIDDEN // NUM_HEADS            # 8
HEADS_PER_KV = NUM_HEADS // NUM_KV_HEADS  # 2
Q_SIZE = NUM_HEADS * HEAD_DIM             # 32
KV_SIZE = NUM_KV_HEADS * HEAD_DIM         # 16
QKV_SIZE = Q_SIZE + 2 * KV_SIZE           # 64
QKV_PAD = 128                             # lane-dense padded qkv slab width
OUT_PAD = 128                             # lane-dense padded output width
ROT = HEAD_DIM // 2                       # rotary_dim = head_dim // 2
SCALING = HEAD_DIM ** -0.5
ROPE_BASE = 10000.0                       # 10000 * rope_ratio (rope_ratio = 1.0)
SEQ = 64
TQ = 16                                   # q/token tile (256+ at real sizes)
TK = 16                                   # kv tile    (256+ at real sizes)
MASK_NEG = -1e30                          # only used on the f32 score path
VMEM_LIMIT = 64 * 1024 * 1024


# ---- Kernel A: fused QKV projection + RoPE (token-tiled) --------------------
def qkv_rope_kernel(x_ref, wp_ref, bp_ref, cos_ref, sa_ref, sb_ref,
                    q_ref, k_ref, v_ref, *, shift_prev, shift_next):
    # Fused QKV: one bf16 MXU matmul + one bias add (lanes padded to 128).
    x = x_ref[...].astype(jnp.bfloat16)
    qkv = jnp.dot(x, wp_ref[...], preferred_element_type=jnp.float32) + bp_ref[...]

    # GPT-J interleaved RoPE on the lane-dense [TQ, 128] slab:
    #   out[L] = qkv[L]*cos[L] + qkv[L+1]*sa[L] + qkv[L-1]*sb[L]
    # sa/sb are zero outside rotary lanes (v / non-rotary / padding pass
    # through) and the q-lane tables also carry the head_dim**-0.5 scaling.
    cos = cos_ref[...].astype(jnp.float32)
    sa = sa_ref[...].astype(jnp.float32)
    sb = sb_ref[...].astype(jnp.float32)
    nxt = pltpu.roll(qkv, shift_next, axis=1)   # lane L <- qkv[:, L+1]
    prv = pltpu.roll(qkv, shift_prev, axis=1)   # lane L <- qkv[:, L-1]
    rot = (qkv * cos + nxt * sa + prv * sb).astype(jnp.bfloat16)  # single cast

    # Export head-major bf16 q/k/v for the batched flash kernel (heads are
    # already kv-group-contiguous: query head h belongs to group h // HpK).
    for h in range(NUM_HEADS):
        q_ref[h] = rot[:, h * HEAD_DIM:(h + 1) * HEAD_DIM]
    for g in range(NUM_KV_HEADS):
        k0 = Q_SIZE + g * HEAD_DIM
        v0 = Q_SIZE + KV_SIZE + g * HEAD_DIM
        k_ref[g] = rot[:, k0:k0 + HEAD_DIM]
        v_ref[g] = rot[:, v0:v0 + HEAD_DIM]


# ---- Kernel B: flash attention (GQA-batched) + fused dense output -----------
def flash_attn_dense_kernel(q_ref, k_ref, v_ref, wo_ref, o_ref,
                            m_scr, l_scr, acc_scr, qg_scr):
    qi = pl.program_id(0)
    ki = pl.program_id(1)
    q_start = qi * TQ
    k_start = ki * TK

    @pl.when(ki == 0)
    def _():
        m_scr[...] = jnp.full(m_scr.shape, -jnp.inf, jnp.float32)
        l_scr[...] = jnp.zeros(l_scr.shape, jnp.float32)
        acc_scr[...] = jnp.zeros(acc_scr.shape, jnp.float32)
        # Re-group q once per q-tile: [nH, TQ, D] -> [nKV, HpK*TQ, D] so the
        # flash dot_generals batch over kv groups (K/V never duplicated).
        q_all = q_ref[...]
        groups = [jnp.concatenate(
            [q_all[g * HEADS_PER_KV + j] for j in range(HEADS_PER_KV)], axis=0)
            for g in range(NUM_KV_HEADS)]
        qg_scr[...] = jnp.stack(groups, axis=0)

    def update(apply_mask):
        q = qg_scr[...]                                       # [nKV, HpK*TQ, D]
        k = k_ref[...]                                        # [nKV, TK, D]
        v = v_ref[...]                                        # [nKV, TK, D]
        # Scores batched over kv groups (scaling already folded into q lanes).
        s = jax.lax.dot_general(q, k, (((2,), (2,)), ((0,), (0,))),
                                preferred_element_type=jnp.float32)
        if apply_mask:   # only the diagonal-touching block pays for the mask
            m_i = jax.lax.broadcasted_iota(jnp.int32, s.shape, 1)
            row = q_start + (m_i & (TQ - 1))      # token row (TQ power of 2)
            col = k_start + jax.lax.broadcasted_iota(jnp.int32, s.shape, 2)
            s = jnp.where(row >= col, s, MASK_NEG)
        # Online-softmax (flash) update with resident VMEM accumulators.
        m_prev = m_scr[...]
        m_new = jnp.maximum(m_prev, jnp.max(s, axis=-1, keepdims=True))
        alpha = jnp.exp(m_prev - m_new)
        p = jnp.exp(s - m_new)
        l_scr[...] = alpha * l_scr[...] + jnp.sum(p, axis=-1, keepdims=True)
        pv = jax.lax.dot_general(p.astype(jnp.bfloat16), v,
                                 (((2,), (1,)), ((0,), (0,))),
                                 preferred_element_type=jnp.float32)
        acc_scr[...] = alpha * acc_scr[...] + pv
        m_scr[...] = m_new

    # Strictly below the diagonal: no masking needed.
    @pl.when(k_start + TK <= q_start)
    def _():
        update(apply_mask=False)

    # Diagonal-touching block: apply the causal mask.  Blocks strictly above
    # the diagonal (k_start >= q_start + TQ) run neither branch -> skipped.
    @pl.when(jnp.logical_and(k_start + TK > q_start, k_start < q_start + TQ))
    def _():
        update(apply_mask=True)

    @pl.when(ki == pl.num_programs(1) - 1)
    def _():
        # Normalize on the EUP, re-pack ctx to a lane-dense [TQ, nH*D] slab,
        # and run ONE output-projection matmul with K = nH*D (MXU reduces over
        # all heads; no per-head intermediates or VALU reduction loop).
        ctx = acc_scr[...] * pl.reciprocal(l_scr[...], approx=True)
        slabs = []
        for g in range(NUM_KV_HEADS):
            for j in range(HEADS_PER_KV):
                slabs.append(ctx[g, j * TQ:(j + 1) * TQ, :])
        ctx2d = jnp.concatenate(slabs, axis=-1).astype(jnp.bfloat16)  # [TQ, nH*D]
        o_ref[...] = jnp.dot(ctx2d, wo_ref[...],
                             preferred_element_type=jnp.float32
                             ).astype(o_ref.dtype)


# ---- wrapper ----------------------------------------------------------------
def glm_attention_pallas(x, wp, bp, cos_t, sa_t, sb_t, wo2, *,
                         shift_prev, shift_next):
    T = x.shape[0]
    assert T % TQ == 0 and T % TK == 0 and (TQ & (TQ - 1)) == 0
    nq, nk = T // TQ, T // TK

    q_hm, k_hm, v_hm = pl.pallas_call(
        functools.partial(qkv_rope_kernel,
                          shift_prev=shift_prev, shift_next=shift_next),
        out_shape=(jax.ShapeDtypeStruct((NUM_HEADS, T, HEAD_DIM), jnp.bfloat16),
                   jax.ShapeDtypeStruct((NUM_KV_HEADS, T, HEAD_DIM), jnp.bfloat16),
                   jax.ShapeDtypeStruct((NUM_KV_HEADS, T, HEAD_DIM), jnp.bfloat16)),
        grid=(nq,),
        in_specs=[pl.BlockSpec((TQ, HIDDEN), lambda i: (i, 0)),
                  pl.BlockSpec((HIDDEN, QKV_PAD), lambda i: (0, 0)),
                  pl.BlockSpec((1, QKV_PAD), lambda i: (0, 0)),
                  pl.BlockSpec((TQ, QKV_PAD), lambda i: (i, 0)),
                  pl.BlockSpec((TQ, QKV_PAD), lambda i: (i, 0)),
                  pl.BlockSpec((TQ, QKV_PAD), lambda i: (i, 0))],
        out_specs=(pl.BlockSpec((NUM_HEADS, TQ, HEAD_DIM), lambda i: (0, i, 0)),
                   pl.BlockSpec((NUM_KV_HEADS, TQ, HEAD_DIM), lambda i: (0, i, 0)),
                   pl.BlockSpec((NUM_KV_HEADS, TQ, HEAD_DIM), lambda i: (0, i, 0))),
        compiler_params=pltpu.CompilerParams(
            dimension_semantics=("parallel",),
            vmem_limit_bytes=VMEM_LIMIT),
    )(x, wp, bp, cos_t, sa_t, sb_t)

    out_pad = pl.pallas_call(
        flash_attn_dense_kernel,
        out_shape=jax.ShapeDtypeStruct((T, OUT_PAD), jnp.bfloat16),
        grid=(nq, nk),
        in_specs=[pl.BlockSpec((NUM_HEADS, TQ, HEAD_DIM), lambda qi, ki: (0, qi, 0)),
                  pl.BlockSpec((NUM_KV_HEADS, TK, HEAD_DIM), lambda qi, ki: (0, ki, 0)),
                  pl.BlockSpec((NUM_KV_HEADS, TK, HEAD_DIM), lambda qi, ki: (0, ki, 0)),
                  pl.BlockSpec((Q_SIZE, OUT_PAD), lambda qi, ki: (0, 0))],
        out_specs=pl.BlockSpec((TQ, OUT_PAD), lambda qi, ki: (qi, 0)),
        scratch_shapes=[
            pltpu.VMEM((NUM_KV_HEADS, HEADS_PER_KV * TQ, 1), jnp.float32),
            pltpu.VMEM((NUM_KV_HEADS, HEADS_PER_KV * TQ, 1), jnp.float32),
            pltpu.VMEM((NUM_KV_HEADS, HEADS_PER_KV * TQ, HEAD_DIM), jnp.float32),
            pltpu.VMEM((NUM_KV_HEADS, HEADS_PER_KV * TQ, HEAD_DIM), jnp.bfloat16)],
        compiler_params=pltpu.CompilerParams(
            dimension_semantics=("parallel", "arbitrary"),
            vmem_limit_bytes=VMEM_LIMIT),
    )(q_hm, k_hm, v_hm, wo2)

    # Toy HIDDEN=32 < 128 needs a host-side slice; at real sizes HIDDEN is a
    # multiple of 128 and OUT_PAD == HIDDEN so this slice disappears.
    return out_pad[:, :HIDDEN]


# ---- one-time probe: resolve pltpu.roll rotation direction ------------------
def _roll_probe_kernel(x_ref, o_ref):
    o_ref[...] = pltpu.roll(x_ref[...], 1, axis=1)


def probe_roll_shifts():
    """Return (shift_prev, shift_next) such that
    pltpu.roll(x, shift_prev, axis=-1)[..., L] == x[..., L-1] and
    pltpu.roll(x, shift_next, axis=-1)[..., L] == x[..., L+1]."""
    probe = jnp.zeros((8, QKV_PAD), jnp.float32).at[:, 0].set(1.0)
    out = np.asarray(pl.pallas_call(
        _roll_probe_kernel,
        out_shape=jax.ShapeDtypeStruct((8, QKV_PAD), jnp.float32))(probe))
    if out[0, 1] == 1.0:           # jnp.roll convention
        return 1, QKV_PAD - 1
    return QKV_PAD - 1, 1


# ---- host-side parameter / table packing ------------------------------------
def build_rope_tables(positions):
    """Per-lane cos and signed-sin tables (bf16) for the [T, QKV_PAD] qkv slab.
    Attention scaling (head_dim**-0.5) is folded into the q lanes."""
    T = positions.shape[0]
    inv_freq = 1.0 / (ROPE_BASE ** (np.arange(0, ROT, 2, dtype=np.float32) / ROT))
    freqs = positions.astype(np.float32)[:, None] * inv_freq[None, :]  # [T, ROT//2]
    cos_f, sin_f = np.cos(freqs), np.sin(freqs)

    cos_t = np.ones((T, QKV_PAD), np.float32)
    sa_t = np.zeros((T, QKV_PAD), np.float32)   # multiplies the "next lane" slab
    sb_t = np.zeros((T, QKV_PAD), np.float32)   # multiplies the "prev lane" slab

    def fill(base, n_heads, scale):
        for h in range(n_heads):
            for i in range(HEAD_DIM):
                lane = base + h * HEAD_DIM + i
                if i < ROT:
                    j = i // 2
                    cos_t[:, lane] = cos_f[:, j] * scale
                    if i % 2 == 0:   # even lane: out = x*cos - x[L+1]*sin
                        sa_t[:, lane] = -sin_f[:, j] * scale
                    else:            # odd lane : out = x*cos + x[L-1]*sin
                        sb_t[:, lane] = sin_f[:, j] * scale
                else:                # non-rotary: pass-through (times scale)
                    cos_t[:, lane] = scale

    fill(0, NUM_HEADS, SCALING)        # q lanes (scaling folded in)
    fill(Q_SIZE, NUM_KV_HEADS, 1.0)    # k lanes
    # v lanes + padding keep cos=1, sin=0 -> identity / stay zero.

    # Design invariant for the lane-wrapping rolls: sa/sb are zero at the wrap
    # boundaries and in the padding, so wrapped lanes never contribute.
    assert np.all(sa_t[:, QKV_SIZE:] == 0) and np.all(sb_t[:, QKV_SIZE:] == 0)
    assert np.all(sb_t[:, 0] == 0) and np.all(sa_t[:, QKV_PAD - 1] == 0)

    return (jnp.asarray(cos_t, jnp.bfloat16), jnp.asarray(sa_t, jnp.bfloat16),
            jnp.asarray(sb_t, jnp.bfloat16), cos_f, sin_f)


def pack_qkv_weights(wq, bq, wk, bk, wv, bv):
    wp = np.zeros((HIDDEN, QKV_PAD), np.float32)
    bp = np.zeros((1, QKV_PAD), np.float32)
    wp[:, :Q_SIZE] = np.asarray(wq)
    wp[:, Q_SIZE:Q_SIZE + KV_SIZE] = np.asarray(wk)
    wp[:, Q_SIZE + KV_SIZE:QKV_SIZE] = np.asarray(wv)
    bp[:, :Q_SIZE] = np.asarray(bq)
    bp[:, Q_SIZE:Q_SIZE + KV_SIZE] = np.asarray(bk)
    bp[:, Q_SIZE + KV_SIZE:QKV_SIZE] = np.asarray(bv)
    return jnp.asarray(wp, jnp.bfloat16), jnp.asarray(bp, jnp.float32)


def pack_dense_weight(wo):
    """RowParallelLinear weight as a single [nH*D, OUT_PAD] bf16 slab so the
    epilogue is one K = nH*D MXU matmul."""
    wo2 = np.zeros((Q_SIZE, OUT_PAD), np.float32)
    wo2[:, :HIDDEN] = np.asarray(wo)
    return jnp.asarray(wo2, jnp.bfloat16)


# ---- pure-JAX reference (f32, for verification) -----------------------------
def reference(x, wq, bq, wk, bk, wv, bv, wo, cos_f, sin_f):
    T = x.shape[0]
    q = x @ wq + bq
    k = x @ wk + bk
    v = x @ wv + bv

    def rope(t, n_heads):
        t = t.reshape(T, n_heads, HEAD_DIM)
        rot, rest = t[..., :ROT], t[..., ROT:]
        x1, x2 = rot[..., 0::2], rot[..., 1::2]
        c = jnp.asarray(cos_f)[:, None, :]
        s = jnp.asarray(sin_f)[:, None, :]
        o1 = x1 * c - x2 * s
        o2 = x2 * c + x1 * s
        rot_out = jnp.stack([o1, o2], axis=-1).reshape(T, n_heads, ROT)
        return jnp.concatenate([rot_out, rest], -1)

    qh = rope(q, NUM_HEADS)
    kh = rope(k, NUM_KV_HEADS)
    vh = v.reshape(T, NUM_KV_HEADS, HEAD_DIM)
    rep = NUM_HEADS // NUM_KV_HEADS
    kh = jnp.repeat(kh, rep, axis=1)
    vh = jnp.repeat(vh, rep, axis=1)
    s = jnp.einsum("thd,shd->hts", qh, kh) * SCALING
    mask = jnp.tril(jnp.ones((T, T), bool))
    s = jnp.where(mask[None], s, MASK_NEG)
    p = jax.nn.softmax(s, axis=-1)
    ctx = jnp.einsum("hts,shd->thd", p, vh).reshape(T, Q_SIZE)
    return ctx @ wo


# ---- main -------------------------------------------------------------------
if __name__ == "__main__":
    key = jax.random.PRNGKey(0)
    ks = jax.random.split(key, 8)
    T = SEQ

    x = jax.random.normal(ks[0], (T, HIDDEN), jnp.float32) * 0.5
    wq = jax.random.normal(ks[1], (HIDDEN, Q_SIZE), jnp.float32) * 0.05
    wk = jax.random.normal(ks[2], (HIDDEN, KV_SIZE), jnp.float32) * 0.05
    wv = jax.random.normal(ks[3], (HIDDEN, KV_SIZE), jnp.float32) * 0.05
    bq = jax.random.normal(ks[4], (1, Q_SIZE), jnp.float32) * 0.02
    bk = jax.random.normal(ks[5], (1, KV_SIZE), jnp.float32) * 0.02
    bv = jax.random.normal(ks[6], (1, KV_SIZE), jnp.float32) * 0.02
    wo = jax.random.normal(ks[7], (Q_SIZE, HIDDEN), jnp.float32) * 0.05

    position_ids = np.arange(T, dtype=np.int32)
    cos_t, sa_t, sb_t, cos_f, sin_f = build_rope_tables(position_ids)
    wp, bp = pack_qkv_weights(wq, bq, wk, bk, wv, bv)
    wo2 = pack_dense_weight(wo)

    shift_prev, shift_next = probe_roll_shifts()

    out = glm_attention_pallas(x, wp, bp, cos_t, sa_t, sb_t, wo2,
                               shift_prev=shift_prev, shift_next=shift_next)
    out = jax.block_until_ready(out)
    assert out.shape == (T, HIDDEN)

    ref = reference(x, wq, bq, wk, bk, wv, bv, wo, cos_f, sin_f)
    np.testing.assert_allclose(np.asarray(out.astype(jnp.float32)),
                               np.asarray(ref), atol=2e-2, rtol=2e-2)
    print("KERNEL_OK")
</pallas_src>

<mosaic_0001>
module attributes {stable_mosaic.version = 11 : i64} {
  func.func @_roll_probe_kernel(%arg0: memref<8x128xf32, #tpu.memory_space<vmem>>, %arg1: memref<8x128xf32, #tpu.memory_space<vmem>>) attributes {dimension_semantics = [], scalar_prefetch = 0 : i64, scratch_operands = 0 : i64, tpu.core_type = #tpu.core_type<tc>} {
    %c0 = arith.constant 0 : index
    %c0_0 = arith.constant 0 : index
    %0 = vector.load %arg0[%c0, %c0_0] : memref<8x128xf32, #tpu.memory_space<vmem>>, vector<8x128xf32>
    %c1_i32 = arith.constant 1 : i32
    %1 = tpu.dynamic_rotate %0 by %c1_i32 dim 1 : vector<8x128xf32>, i32 -> vector<8x128xf32>
    %c0_1 = arith.constant 0 : index
    %c0_2 = arith.constant 0 : index
    %2 = vector.load %arg1[%c0_1, %c0_2] : memref<8x128xf32, #tpu.memory_space<vmem>>, vector<8x128xf32>
    tpu.vector_store %arg1[%c0_1, %c0_2], %1 {strides = array<i32>} : memref<8x128xf32, #tpu.memory_space<vmem>>, vector<8x128xf32>,
    return
  }
}

</mosaic_0001>

<llo_original>
// kernel: tpu_custom_call.1
$region0: #{tpu_custom_call.1}
  #allocation0 [shape = 'u32[]', space=smem, size = 0x4, offset = 0x4, fixed_abs, tag = 'smem constant byte address 0x4 - core index']
  #allocation1 [shape = 'u32[72,128]{1,0:T(1,128)}', space=vmem, size = 0x9000, scoped, tag = 'internal scratch']
  %s0 = inlined_call_operand.hbm [shape: f32[8,128], index: 0, kind: input, shape index: {}]
  %s1 = inlined_call_operand.hbm [shape: f32[8,128], index: 1, kind: output, shape index: {}]
  %s2 = sld [smem:[#allocation0]]
  $region18: #{tpu_custom_call.1} parent=0
    _
  %s4 = ssub.s32 1, %s2
  %s5 = scalar_select 0, %s4, %s2
  $region1: #{tpu_custom_call.1} parent=0
    #allocation2 [shape = 'u8[4096]{0}', space=vmem, size = 0x1000, scoped, tag = 'input window, operand 0, single buffered']
    #allocation3 [shape = 's32[1]{0}', space=sflag, size = 0x4, scoped, tag = 'scoped memory for tpu_custom_call.1']
    #allocation4 [shape = 's32[1]{0}', space=sflag, size = 0x4, scoped, tag = 'scoped memory for tpu_custom_call.1']
    #allocation5 [shape = 'u8[4096]{0}', space=vmem, size = 0x1000, scoped, tag = 'output window, operand 0, single buffered']
    %6 = vsyncpa [#allocation3], 0
    %7 = vsyncpa [#allocation4], 0
    // Predicated region
    $region2: #{tpu_custom_call.1} parent=1 // pred_check
      _
    $region3: #{tpu_custom_call.1} parent=1 // pred_check_branch
      %9 = sbr.rel (0) target = $region5
    $region4: #{tpu_custom_call.1} parent=1 // pred_region
      %11 = vsyncadd [#allocation3], 0
      %s13 = sshll.u32 %s0, 4
      %s14 = int_to_ptr.hbm [resolvable:$true] %s13
      %s15 = sshll.u32 [#allocation2], 4
      %s16 = int_to_ptr.vmem [resolvable:$true] %s15
      %18 = dma.hbm_to_vmem [thread:$0]  %s14, 128, %s16, [#allocation3]
    $region5: #{tpu_custom_call.1} parent=1 // pred_fallthru
      _
    // Predicated region
    $region6: #{tpu_custom_call.1} parent=1 // pred_check
      _
    $region7: #{tpu_custom_call.1} parent=1 // pred_check_branch
      %20 = sbr.rel (0) target = $region9
    $region8: #{tpu_custom_call.1} parent=1 // pred_region
      %22 = dma.done [#allocation3], 128
    $region9: #{tpu_custom_call.1} parent=1 // pred_fallthru
      _
    %v23 = vld [vmem:[#allocation2] sm:$0xff]
    %24 = vrot.lane.b32.xlu0 %v23, 1
    %v25 = vpop.permute.xlu0 %24
    %26 = vst [vmem:[#allocation5] sm:$0xff] %v25
    // Predicated region
    $region10: #{tpu_custom_call.1} parent=1 // pred_check
      _
    $region11: #{tpu_custom_call.1} parent=1 // pred_check_branch
      %28 = sbr.rel (0) target = $region13
    $region12: #{tpu_custom_call.1} parent=1 // pred_region
      %30 = vsyncadd [#allocation4], 0
      %s32 = sshll.u32 [#allocation5], 4
      %s33 = int_to_ptr.vmem [resolvable:$true] %s32
      %s34 = sshll.u32 %s1, 4
      %s35 = int_to_ptr.hbm [resolvable:$true] %s34
      %37 = dma.vmem_to_hbm [thread:$0]  %s33, 128, %s35, [#allocation4]
    $region13: #{tpu_custom_call.1} parent=1 // pred_fallthru
      _
    // Predicated region
    $region14: #{tpu_custom_call.1} parent=1 // pred_check
      _
    $region15: #{tpu_custom_call.1} parent=1 // pred_check_branch
      %39 = sbr.rel (0) target = $region17
    $region16: #{tpu_custom_call.1} parent=1 // pred_region
      %41 = dma.done [#allocation4], 128
    $region17: #{tpu_custom_call.1} parent=1 // pred_fallthru
      _
    %42 = vsyncpa [#allocation3], 1
    %43 = vsyncpa [#allocation4], 1

</llo_original>
